<compile_context>
chip_gen: v6e
topology: v6e:2x2x1
jax: 0.10.0
libtpu: 0.0.40
codegen_flags: <defaults>
</compile_context>

<pallas_src>
import jax
import jax.numpy as jnp
from jax import lax
from jax.experimental import pallas as pl
from jax.experimental.pallas import tpu as pltpu


# ----------------------------- Pallas kernel ------------------------------ #
def text_encoder_kernel(cls_ref,   # VMEM (TB, 768)    bf16 : CLS_token_state tile
                        w_ref,     # VMEM (512, 768)   bf16 : Linear weight (out,in), lane-padded
                        b_ref,     # VMEM (1, 512)     f32  : Linear bias, lane-padded
                        out_ref):  # VMEM (TB, 512)    f32  : x = embedding_layer(cls)
    # x = cls @ W.T + b, computed without materializing W.T: contract the
    # minor (lane) dim of both operands so Mosaic feeds the MXU directly.
    y = lax.dot_general(
        cls_ref[...], w_ref[...],
        dimension_numbers=(((1,), (1,)), ((), ())),
        preferred_element_type=jnp.float32)          # bf16 x bf16 -> f32 accumulate
    out_ref[...] = y + b_ref[...]                    # bias add in f32


# --------------------- frozen DistilBERT stand-in (glue) ------------------- #
def synthetic_distilbert(params, input_ids, attention_mask):
    # TODO(synk): DistilBertModel.from_pretrained('distilbert-base-uncased') is a
    # frozen external pretrained transformer; it cannot be loaded here (no file /
    # network I/O) and has no clean single-kernel Pallas equivalent, so it is
    # realized as a deterministic frozen stand-in producing last_hidden_state
    # of the correct (B, S, 768) shape (token + position embeddings plus a
    # mask-weighted cross-token mixing term).
    tok = params["db_tok_emb"][input_ids]                          # (B, S, 768)
    pos = params["db_pos_emb"][None, : input_ids.shape[1], :]      # (1, S, 768)
    h = tok + pos
    m = attention_mask[..., None].astype(jnp.float32)
    ctx = (h * m).sum(axis=1, keepdims=True) / jnp.maximum(
        m.sum(axis=1, keepdims=True), 1.0)
    return h + ctx


# ------------------------------ JAX wrapper -------------------------------- #
def text_encoder_forward(params, input_id_report, attention_mask_report):
    # input_id_report.squeeze(0)
    ids = jnp.squeeze(input_id_report, axis=0)                     # (B, S)

    # frozen external encoder (glue) + CLS token state
    last_hidden_state = synthetic_distilbert(params, ids, attention_mask_report)
    cls = last_hidden_state[:, 0, :]                               # (B, 768)

    b, k = cls.shape
    n_out = params["w_emb"].shape[0]                               # 400
    n_pad = pl.cdiv(n_out, 128) * 128                              # 512 (lane-dense)

    # Parameter prep (once per call here; in training this is param-prep time):
    # pad the (out, in) weight to a lane-dense output width and cast matmul
    # operands to bf16; keep bias / accumulation / epilogue in f32.
    w_pad = (jnp.zeros((n_pad, k), jnp.float32)
             .at[:n_out, :].set(params["w_emb"])
             .astype(jnp.bfloat16))                                # (512, 768) bf16
    b_pad = (jnp.zeros((1, n_pad), jnp.float32)
             .at[0, :n_out].set(params["b_emb"]))                  # (1, 512)  f32
    cls_bf16 = cls.astype(jnp.bfloat16)                            # (B, 768)  bf16

    tb = b                                                         # one batch tile at this size
    out_padded = pl.pallas_call(
        text_encoder_kernel,
        out_shape=jax.ShapeDtypeStruct((b, n_pad), jnp.float32),
        grid=(b // tb,),
        in_specs=[
            pl.BlockSpec((tb, k), lambda i: (i, 0)),               # CLS tile
            pl.BlockSpec((n_pad, k), lambda i: (0, 0)),            # weight (resident)
            pl.BlockSpec((1, n_pad), lambda i: (0, 0)),            # bias   (resident)
        ],
        out_specs=pl.BlockSpec((tb, n_pad), lambda i: (i, 0)),
        compiler_params=pltpu.CompilerParams(
            dimension_semantics=("parallel",)),                    # batch tiles are independent
    )(cls_bf16, w_pad, b_pad)

    return out_padded[:, :n_out]                                   # drop lane padding -> (B, 400)


# -------------------------- reference (pure JAX) --------------------------- #
def text_encoder_reference(params, input_id_report, attention_mask_report):
    ids = jnp.squeeze(input_id_report, axis=0)
    h = synthetic_distilbert(params, ids, attention_mask_report)
    cls = h[:, 0, :]
    return (jnp.dot(cls, params["w_emb"].T, precision=lax.Precision.HIGHEST)
            + params["b_emb"])


# ---------------------------------- main ----------------------------------- #
if __name__ == "__main__":
    B, S, VOCAB = 8, 8, 100
    HIDDEN, EMB = 768, 400          # distilbert_output_size=768, embedding_size=400

    key = jax.random.PRNGKey(0)
    keys = jax.random.split(key, 5)

    # module receives input_ids with a leading singleton dim (it calls .squeeze(0))
    input_id_report = jax.random.randint(keys[0], (1, B, S), 0, VOCAB)
    attention_mask_report = jnp.ones((B, S), jnp.int32)

    params = {
        # frozen DistilBERT stand-in parameters (requires_grad_(False) in the module)
        "db_tok_emb": 0.05 * jax.random.normal(keys[1], (VOCAB, HIDDEN), jnp.float32),
        "db_pos_emb": 0.05 * jax.random.normal(keys[2], (S, HIDDEN), jnp.float32),
        # embedding_layer = nn.Linear(768, 400): weight is (out, in) like PyTorch
        "w_emb": 0.05 * jax.random.normal(keys[3], (EMB, HIDDEN), jnp.float32),
        "b_emb": 0.05 * jax.random.normal(keys[4], (EMB,), jnp.float32),
    }

    out = text_encoder_forward(params, input_id_report, attention_mask_report)
    jax.block_until_ready(out)

    ref = text_encoder_reference(params, input_id_report, attention_mask_report)
    assert out.shape == (B, EMB), out.shape
    assert jnp.allclose(out, ref, atol=2e-2, rtol=2e-2), float(jnp.max(jnp.abs(out - ref)))

    print("KERNEL_OK")
</pallas_src>

<mosaic_0001>
module attributes {stable_mosaic.version = 11 : i64} {
  func.func @text_encoder_kernel(%arg0: i32, %arg1: memref<8x768xbf16, #tpu.memory_space<vmem>>, %arg2: memref<512x768xbf16, #tpu.memory_space<vmem>>, %arg3: memref<1x512xf32, #tpu.memory_space<vmem>>, %arg4: memref<8x512xf32, #tpu.memory_space<vmem>>) attributes {dimension_semantics = [#tpu.dimension_semantics<parallel>], iteration_bounds = array<i64: 1>, scalar_prefetch = 0 : i64, scratch_operands = 0 : i64, tpu.core_type = #tpu.core_type<tc>, window_params = [{transform_indices = @transform_0, window_bounds = array<i64: 8, 768>}, {pipeline_mode = #tpu.pipeline_mode<synchronous>, transform_indices = @transform_1, window_bounds = array<i64: 512, 768>}, {pipeline_mode = #tpu.pipeline_mode<synchronous>, transform_indices = @transform_2, window_bounds = array<i64: 1, 512>}, {transform_indices = @transform_3, window_bounds = array<i64: 8, 512>}]} {
    %c0 = arith.constant 0 : index
    %c0_0 = arith.constant 0 : index
    %0 = vector.load %arg1[%c0, %c0_0] : memref<8x768xbf16, #tpu.memory_space<vmem>>, vector<8x768xbf16>
    %c0_1 = arith.constant 0 : index
    %c0_2 = arith.constant 0 : index
    %1 = vector.load %arg2[%c0_1, %c0_2] : memref<512x768xbf16, #tpu.memory_space<vmem>>, vector<512x768xbf16>
    %cst = arith.constant dense<0.000000e+00> : vector<8x512xf32>
    %2 = tpu.matmul %0, %1, %cst {dimension_numbers = #tpu.dot_dimension_numbers<[1], [1], [0], [0], [0, 0, 1, 0], [], []>} : vector<8x768xbf16>, vector<512x768xbf16>, vector<8x512xf32> -> vector<8x512xf32>
    %c0_3 = arith.constant 0 : index
    %c0_4 = arith.constant 0 : index
    %3 = vector.load %arg3[%c0_3, %c0_4] : memref<1x512xf32, #tpu.memory_space<vmem>>, vector<1x512xf32>
    %4 = vector.broadcast %3 : vector<1x512xf32> to vector<8x512xf32>
    %5 = arith.addf %2, %4 : vector<8x512xf32>
    %c0_5 = arith.constant 0 : index
    %c0_6 = arith.constant 0 : index
    %6 = vector.load %arg4[%c0_5, %c0_6] : memref<8x512xf32, #tpu.memory_space<vmem>>, vector<8x512xf32>
    tpu.vector_store %arg4[%c0_5, %c0_6], %5 {strides = array<i32>} : memref<8x512xf32, #tpu.memory_space<vmem>>, vector<8x512xf32>,
    return
  }
  func.func @transform_0(%arg0: i32) -> (i32, i32) {
    %c0_i32 = arith.constant 0 : i32
    %c0_i32_0 = arith.constant 0 : i32
    return %arg0, %c0_i32 : i32, i32
  }
  func.func @transform_1(%arg0: i32) -> (i32, i32) {
    %c0_i32 = arith.constant 0 : i32
    %c0_i32_0 = arith.constant 0 : i32
    %c0_i32_1 = arith.constant 0 : i32
    return %c0_i32, %c0_i32_0 : i32, i32
  }
  func.func @transform_2(%arg0: i32) -> (i32, i32) {
    %c0_i32 = arith.constant 0 : i32
    %c0_i32_0 = arith.constant 0 : i32
    %c0_i32_1 = arith.constant 0 : i32
    return %c0_i32, %c0_i32_0 : i32, i32
  }
  func.func @transform_3(%arg0: i32) -> (i32, i32) {
    %c0_i32 = arith.constant 0 : i32
    %c0_i32_0 = arith.constant 0 : i32
    return %arg0, %c0_i32 : i32, i32
  }
}

</mosaic_0001>

<llo_original>
// kernel: tpu_custom_call.1
$region0: #{tpu_custom_call.1}
  #allocation0 [shape = 'u32[]', space=smem, size = 0x4, offset = 0x4, fixed_abs, tag = 'smem constant byte address 0x4 - core index']
  #allocation1 [shape = 'u32[144,128]{1,0:T(1,128)}', space=vmem, size = 0x12000, scoped, tag = 'internal scratch']
  %s0 = inlined_call_operand.hbm [shape: bf16[8,768], index: 0, kind: input, shape index: {}]
  %s1 = inlined_call_operand.hbm [shape: bf16[512,768], index: 1, kind: input, shape index: {}]
  %s2 = inlined_call_operand.hbm [shape: f32[1,512], index: 2, kind: input, shape index: {}]
  %s3 = inlined_call_operand.hbm [shape: f32[8,512], index: 3, kind: output, shape index: {}]
  %s4 = sld [smem:[#allocation0]]
  $region34: #{tpu_custom_call.1} parent=0
    _
  %s6 = ssub.s32 1, %s4
  %s7 = scalar_select 0, %s6, %s4
  $region1: #{tpu_custom_call.1} parent=0
    #allocation2 [shape = 'u8[12288]{0}', space=vmem, size = 0x3000, scoped, tag = 'input window, operand 0, single buffered']
    #allocation3 [shape = 's32[1]{0}', space=sflag, size = 0x4, scoped, tag = 'scoped memory for tpu_custom_call.1']
    #allocation4 [shape = 's32[1]{0}', space=sflag, size = 0x4, scoped, tag = 'scoped memory for tpu_custom_call.1']
    #allocation5 [shape = 'u8[786432]{0}', space=vmem, size = 0xc0000, scoped, tag = 'input window, operand 1, single buffered']
    #allocation6 [shape = 's32[1]{0}', space=sflag, size = 0x4, scoped, tag = 'scoped memory for tpu_custom_call.1']
    #allocation7 [shape = 'u8[2048]{0}', space=vmem, size = 0x800, scoped, tag = 'input window, operand 2, single buffered']
    #allocation8 [shape = 'u8[16384]{0}', space=vmem, size = 0x4000, scoped, tag = 'output window, operand 0, single buffered']
    %8 = vsyncpa [#allocation3], 0
    %9 = vsyncpa [#allocation6], 0
    %10 = vsyncpa [#allocation4], 0
    // Predicated region
    $region2: #{tpu_custom_call.1} parent=1 // pred_check
      _
    $region3: #{tpu_custom_call.1} parent=1 // pred_check_branch
      %12 = sbr.rel (0) target = $region5
    $region4: #{tpu_custom_call.1} parent=1 // pred_region
      %s14 = ssub.s32 384, 384
      %15 = vsyncadd [#allocation3], %s14
      %s17 = sshll.u32 [#allocation2], 4
      %s18 = int_to_ptr.vmem [resolvable:$true] %s17
      %20 = dma.hbm_to_vmem [thread:$0]  %s0, 384, %s18, [#allocation3]
    $region5: #{tpu_custom_call.1} parent=1 // pred_fallthru
      _
    // Predicated region
    $region6: #{tpu_custom_call.1} parent=1 // pred_check
      _
    $region7: #{tpu_custom_call.1} parent=1 // pred_check_branch
      %22 = sbr.rel (0) target = $region9
    $region8: #{tpu_custom_call.1} parent=1 // pred_region
      %s24 = ssub.s32 24576, 24576
      %25 = vsyncadd [#allocation6], %s24
      %s26 = sshll.u32 [#allocation5], 4
      %s27 = int_to_ptr.vmem [resolvable:$true] %s26
      %32 = dma.hbm_to_vmem [thread:$0]  %s1, 24576, %s27, [#allocation6], 384, 384, 24
    $region9: #{tpu_custom_call.1} parent=1 // pred_fallthru
      _
    // Predicated region
    $region10: #{tpu_custom_call.1} parent=1 // pred_check
      _
    $region11: #{tpu_custom_call.1} parent=1 // pred_check_branch
      %34 = sbr.rel (0) target = $region13
    $region12: #{tpu_custom_call.1} parent=1 // pred_region
      %s36 = ssub.s32 64, 64
      %37 = vsyncadd [#allocation6], %s36
      %s39 = sshll.u32 [#allocation7], 4
      %s40 = int_to_ptr.vmem [resolvable:$true] %s39
      %42 = dma.hbm_to_vmem [thread:$0]  %s2, 64, %s40, [#allocation6]
    $region13: #{tpu_custom_call.1} parent=1 // pred_fallthru
      _
    // Predicated region
    $region14: #{tpu_custom_call.1} parent=1 // pred_check
      _
    $region15: #{tpu_custom_call.1} parent=1 // pred_check_branch
      %44 = sbr.rel (0) target = $region17
    $region16: #{tpu_custom_call.1} parent=1 // pred_region
      %45 = dma.done [#allocation3], 384
    $region17: #{tpu_custom_call.1} parent=1 // pred_fallthru
      _
    // Predicated region
    $region18: #{tpu_custom_call.1} parent=1 // pred_check
      _
    $region19: #{tpu_custom_call.1} parent=1 // pred_check_branch
      %47 = sbr.rel (0) target = $region21
    $region20: #{tpu_custom_call.1} parent=1 // pred_region
      %48 = dma.done [#allocation6], 24576
    $region21: #{tpu_custom_call.1} parent=1 // pred_fallthru
      _
    // Predicated region
    $region22: #{tpu_custom_call.1} parent=1 // pred_check
      _
    $region23: #{tpu_custom_call.1} parent=1 // pred_check_branch
      %50 = sbr.rel (0) target = $region25
    $region24: #{tpu_custom_call.1} parent=1 // pred_region
      %51 = dma.done [#allocation6], 64
    $region25: #{tpu_custom_call.1} parent=1 // pred_fallthru
      _
    %v52 = vld [vmem:[#allocation2] sm:$0xff]
    %v53 = vld [vmem:[#allocation2 + $0x8] sm:$0xff]
    %v54 = vld [vmem:[#allocation2 + $0x10] sm:$0xff]
    %v55 = vld [vmem:[#allocation5] sm:$0xff]
    %v56 = vld [vmem:[#allocation5 + $0x8] sm:$0xff]
    %v57 = vld [vmem:[#allocation5 + $0x10] sm:$0xff]
    %v58 = vld [vmem:[#allocation5 + $0x18] sm:$0xff]
    %v59 = vld [vmem:[#allocation5 + $0x20] sm:$0xff]
    %v60 = vld [vmem:[#allocation5 + $0x28] sm:$0xff]
    %v61 = vld [vmem:[#allocation5 + $0x30] sm:$0xff]
    %v62 = vld [vmem:[#allocation5 + $0x38] sm:$0xff]
    %v63 = vld [vmem:[#allocation5 + $0x40] sm:$0xff]
    %v64 = vld [vmem:[#allocation5 + $0x48] sm:$0xff]
    %v65 = vld [vmem:[#allocation5 + $0x50] sm:$0xff]
    %v66 = vld [vmem:[#allocation5 + $0x58] sm:$0xff]
    %v67 = vld [vmem:[#allocation5 + $0x60] sm:$0xff]
    %v68 = vld [vmem:[#allocation5 + $0x68] sm:$0xff]
    %v69 = vld [vmem:[#allocation5 + $0x70] sm:$0xff]
    %v70 = vld [vmem:[#allocation5 + $0x78] sm:$0xff]
    %v71 = vld [vmem:[#allocation5 + $0x80] sm:$0xff]
    %v72 = vld [vmem:[#allocation5 + $0x88] sm:$0xff]
    %v73 = vld [vmem:[#allocation5 + $0x90] sm:$0xff]
    %v74 = vld [vmem:[#allocation5 + $0x98] sm:$0xff]
    %v75 = vld [vmem:[#allocation5 + $0xa0] sm:$0xff]
    %v76 = vld [vmem:[#allocation5 + $0xa8] sm:$0xff]
    %v77 = vld [vmem:[#allocation5 + $0xb0] sm:$0xff]
    %v78 = vld [vmem:[#allocation5 + $0xb8] sm:$0xff]
    %v79 = vld [vmem:[#allocation5 + $0xc0] sm:$0xff]
    %v80 = vld [vmem:[#allocation5 + $0xc8] sm:$0xff]
    %v81 = vld [vmem:[#allocation5 + $0xd0] sm:$0xff]
    %v82 = vld [vmem:[#allocation5 + $0xd8] sm:$0xff]
    %v83 = vld [vmem:[#allocation5 + $0xe0] sm:$0xff]
    %v84 = vld [vmem:[#allocation5 + $0xe8] sm:$0xff]
    %v85 = vld [vmem:[#allocation5 + $0xf0] sm:$0xff]
    %v86 = vld [vmem:[#allocation5 + $0xf8] sm:$0xff]
    %v87 = vld [vmem:[#allocation5 + $0x100] sm:$0xff]
    %v88 = vld [vmem:[#allocation5 + $0x108] sm:$0xff]
    %v89 = vld [vmem:[#allocation5 + $0x110] sm:$0xff]
    %v90 = vld [vmem:[#allocation5 + $0x118] sm:$0xff]
    %v91 = vld [vmem:[#allocation5 + $0x120] sm:$0xff]
    %v92 = vld [vmem:[#allocation5 + $0x128] sm:$0xff]
    %v93 = vld [vmem:[#allocation5 + $0x130] sm:$0xff]
    %v94 = vld [vmem:[#allocation5 + $0x138] sm:$0xff]
    %v95 = vld [vmem:[#allocation5 + $0x140] sm:$0xff]
    %v96 = vld [vmem:[#allocation5 + $0x148] sm:$0xff]
    %v97 = vld [vmem:[#allocation5 + $0x150] sm:$0xff]
    %v98 = vld [vmem:[#allocation5 + $0x158] sm:$0xff]
    %v99 = vld [vmem:[#allocation5 + $0x160] sm:$0xff]
    %v100 = vld [vmem:[#allocation5 + $0x168] sm:$0xff]
    %v101 = vld [vmem:[#allocation5 + $0x170] sm:$0xff]
    %v102 = vld [vmem:[#allocation5 + $0x178] sm:$0xff]
    %v103 = vld [vmem:[#allocation5 + $0x180] sm:$0xff]
    %v104 = vld [vmem:[#allocation5 + $0x188] sm:$0xff]
    %v105 = vld [vmem:[#allocation5 + $0x190] sm:$0xff]
    %v106 = vld [vmem:[#allocation5 + $0x198] sm:$0xff]
    %v107 = vld [vmem:[#allocation5 + $0x1a0] sm:$0xff]
    %v108 = vld [vmem:[#allocation5 + $0x1a8] sm:$0xff]
    %v109 = vld [vmem:[#allocation5 + $0x1b0] sm:$0xff]
    %v110 = vld [vmem:[#allocation5 + $0x1b8] sm:$0xff]
    %v111 = vld [vmem:[#allocation5 + $0x1c0] sm:$0xff]
    %v112 = vld [vmem:[#allocation5 + $0x1c8] sm:$0xff]
    %v113 = vld [vmem:[#allocation5 + $0x1d0] sm:$0xff]
    %v114 = vld [vmem:[#allocation5 + $0x1d8] sm:$0xff]
    %v115 = vld [vmem:[#allocation5 + $0x1e0] sm:$0xff]
    %v116 = vld [vmem:[#allocation5 + $0x1e8] sm:$0xff]
    %v117 = vld [vmem:[#allocation5 + $0x1f0] sm:$0xff]
    %v118 = vld [vmem:[#allocation5 + $0x1f8] sm:$0xff]
    %v119 = vld [vmem:[#allocation5 + $0x200] sm:$0xff]
    %v120 = vld [vmem:[#allocation5 + $0x208] sm:$0xff]
    %v121 = vld [vmem:[#allocation5 + $0x210] sm:$0xff]
    %v122 = vld [vmem:[#allocation5 + $0x218] sm:$0xff]
    %v123 = vld [vmem:[#allocation5 + $0x220] sm:$0xff]
    %v124 = vld [vmem:[#allocation5 + $0x228] sm:$0xff]
    %v125 = vld [vmem:[#allocation5 + $0x230] sm:$0xff]
    %v126 = vld [vmem:[#allocation5 + $0x238] sm:$0xff]
    %v127 = vld [vmem:[#allocation5 + $0x240] sm:$0xff]
    %v128 = vld [vmem:[#allocation5 + $0x248] sm:$0xff]
    %v129 = vld [vmem:[#allocation5 + $0x250] sm:$0xff]
    %v130 = vld [vmem:[#allocation5 + $0x258] sm:$0xff]
    %v131 = vld [vmem:[#allocation5 + $0x260] sm:$0xff]
    %v132 = vld [vmem:[#allocation5 + $0x268] sm:$0xff]
    %v133 = vld [vmem:[#allocation5 + $0x270] sm:$0xff]
    %v134 = vld [vmem:[#allocation5 + $0x278] sm:$0xff]
    %v135 = vld [vmem:[#allocation5 + $0x280] sm:$0xff]
    %v136 = vld [vmem:[#allocation5 + $0x288] sm:$0xff]
    %v137 = vld [vmem:[#allocation5 + $0x290] sm:$0xff]
    %v138 = vld [vmem:[#allocation5 + $0x298] sm:$0xff]
    %v139 = vld [vmem:[#allocation5 + $0x2a0] sm:$0xff]
    %v140 = vld [vmem:[#allocation5 + $0x2a8] sm:$0xff]
    %v141 = vld [vmem:[#allocation5 + $0x2b0] sm:$0xff]
    %v142 = vld [vmem:[#allocation5 + $0x2b8] sm:$0xff]
    %v143 = vld [vmem:[#allocation5 + $0x2c0] sm:$0xff]
    %v144 = vld [vmem:[#allocation5 + $0x2c8] sm:$0xff]
    %v145 = vld [vmem:[#allocation5 + $0x2d0] sm:$0xff]
    %v146 = vld [vmem:[#allocation5 + $0x2d8] sm:$0xff]
    %v147 = vld [vmem:[#allocation5 + $0x2e0] sm:$0xff]
    %v148 = vld [vmem:[#allocation5 + $0x2e8] sm:$0xff]
    %v149 = vld [vmem:[#allocation5 + $0x2f0] sm:$0xff]
    %v150 = vld [vmem:[#allocation5 + $0x2f8] sm:$0xff]
    %v151 = vld [vmem:[#allocation5 + $0x300] sm:$0xff]
    %v152 = vld [vmem:[#allocation5 + $0x308] sm:$0xff]
    %v153 = vld [vmem:[#allocation5 + $0x310] sm:$0xff]
    %v154 = vld [vmem:[#allocation5 + $0x318] sm:$0xff]
    %v155 = vld [vmem:[#allocation5 + $0x320] sm:$0xff]
    %v156 = vld [vmem:[#allocation5 + $0x328] sm:$0xff]
    %v157 = vld [vmem:[#allocation5 + $0x330] sm:$0xff]
    %v158 = vld [vmem:[#allocation5 + $0x338] sm:$0xff]
    %v159 = vld [vmem:[#allocation5 + $0x340] sm:$0xff]
    %v160 = vld [vmem:[#allocation5 + $0x348] sm:$0xff]
    %v161 = vld [vmem:[#allocation5 + $0x350] sm:$0xff]
    %v162 = vld [vmem:[#allocation5 + $0x358] sm:$0xff]
    %v163 = vld [vmem:[#allocation5 + $0x360] sm:$0xff]
    %v164 = vld [vmem:[#allocation5 + $0x368] sm:$0xff]
    %v165 = vld [vmem:[#allocation5 + $0x370] sm:$0xff]
    %v166 = vld [vmem:[#allocation5 + $0x378] sm:$0xff]
    %v167 = vld [vmem:[#allocation5 + $0x380] sm:$0xff]
    %v168 = vld [vmem:[#allocation5 + $0x388] sm:$0xff]
    %v169 = vld [vmem:[#allocation5 + $0x390] sm:$0xff]
    %v170 = vld [vmem:[#allocation5 + $0x398] sm:$0xff]
    %v171 = vld [vmem:[#allocation5 + $0x3a0] sm:$0xff]
    %v172 = vld [vmem:[#allocation5 + $0x3a8] sm:$0xff]
    %v173 = vld [vmem:[#allocation5 + $0x3b0] sm:$0xff]
    %v174 = vld [vmem:[#allocation5 + $0x3b8] sm:$0xff]
    %v175 = vld [vmem:[#allocation5 + $0x3c0] sm:$0xff]
    %v176 = vld [vmem:[#allocation5 + $0x3c8] sm:$0xff]
    %v177 = vld [vmem:[#allocation5 + $0x3d0] sm:$0xff]
    %v178 = vld [vmem:[#allocation5 + $0x3d8] sm:$0xff]
    %v179 = vld [vmem:[#allocation5 + $0x3e0] sm:$0xff]
    %v180 = vld [vmem:[#allocation5 + $0x3e8] sm:$0xff]
    %v181 = vld [vmem:[#allocation5 + $0x3f0] sm:$0xff]
    %v182 = vld [vmem:[#allocation5 + $0x3f8] sm:$0xff]
    %v183 = vld [vmem:[#allocation5 + $0x400] sm:$0xff]
    %v184 = vld [vmem:[#allocation5 + $0x408] sm:$0xff]
    %v185 = vld [vmem:[#allocation5 + $0x410] sm:$0xff]
    %v186 = vld [vmem:[#allocation5 + $0x418] sm:$0xff]
    %v187 = vld [vmem:[#allocation5 + $0x420] sm:$0xff]
    %v188 = vld [vmem:[#allocation5 + $0x428] sm:$0xff]
    %v189 = vld [vmem:[#allocation5 + $0x430] sm:$0xff]
    %v190 = vld [vmem:[#allocation5 + $0x438] sm:$0xff]
    %v191 = vld [vmem:[#allocation5 + $0x440] sm:$0xff]
    %v192 = vld [vmem:[#allocation5 + $0x448] sm:$0xff]
    %v193 = vld [vmem:[#allocation5 + $0x450] sm:$0xff]
    %v194 = vld [vmem:[#allocation5 + $0x458] sm:$0xff]
    %v195 = vld [vmem:[#allocation5 + $0x460] sm:$0xff]
    %v196 = vld [vmem:[#allocation5 + $0x468] sm:$0xff]
    %v197 = vld [vmem:[#allocation5 + $0x470] sm:$0xff]
    %v198 = vld [vmem:[#allocation5 + $0x478] sm:$0xff]
    %v199 = vld [vmem:[#allocation5 + $0x480] sm:$0xff]
    %v200 = vld [vmem:[#allocation5 + $0x488] sm:$0xff]
    %v201 = vld [vmem:[#allocation5 + $0x490] sm:$0xff]
    %v202 = vld [vmem:[#allocation5 + $0x498] sm:$0xff]
    %v203 = vld [vmem:[#allocation5 + $0x4a0] sm:$0xff]
    %v204 = vld [vmem:[#allocation5 + $0x4a8] sm:$0xff]
    %v205 = vld [vmem:[#allocation5 + $0x4b0] sm:$0xff]
    %v206 = vld [vmem:[#allocation5 + $0x4b8] sm:$0xff]
    %v207 = vld [vmem:[#allocation5 + $0x4c0] sm:$0xff]
    %v208 = vld [vmem:[#allocation5 + $0x4c8] sm:$0xff]
    %v209 = vld [vmem:[#allocation5 + $0x4d0] sm:$0xff]
    %v210 = vld [vmem:[#allocation5 + $0x4d8] sm:$0xff]
    %v211 = vld [vmem:[#allocation5 + $0x4e0] sm:$0xff]
    %v212 = vld [vmem:[#allocation5 + $0x4e8] sm:$0xff]
    %v213 = vld [vmem:[#allocation5 + $0x4f0] sm:$0xff]
    %v214 = vld [vmem:[#allocation5 + $0x4f8] sm:$0xff]
    %v215 = vld [vmem:[#allocation5 + $0x500] sm:$0xff]
    %v216 = vld [vmem:[#allocation5 + $0x508] sm:$0xff]
    %v217 = vld [vmem:[#allocation5 + $0x510] sm:$0xff]
    %v218 = vld [vmem:[#allocation5 + $0x518] sm:$0xff]
    %v219 = vld [vmem:[#allocation5 + $0x520] sm:$0xff]
    %v220 = vld [vmem:[#allocation5 + $0x528] sm:$0xff]
    %v221 = vld [vmem:[#allocation5 + $0x530] sm:$0xff]
    %v222 = vld [vmem:[#allocation5 + $0x538] sm:$0xff]
    %v223 = vld [vmem:[#allocation5 + $0x540] sm:$0xff]
    %v224 = vld [vmem:[#allocation5 + $0x548] sm:$0xff]
    %v225 = vld [vmem:[#allocation5 + $0x550] sm:$0xff]
    %v226 = vld [vmem:[#allocation5 + $0x558] sm:$0xff]
    %v227 = vld [vmem:[#allocation5 + $0x560] sm:$0xff]
    %v228 = vld [vmem:[#allocation5 + $0x568] sm:$0xff]
    %v229 = vld [vmem:[#allocation5 + $0x570] sm:$0xff]
    %v230 = vld [vmem:[#allocation5 + $0x578] sm:$0xff]
    %v231 = vld [vmem:[#allocation5 + $0x580] sm:$0xff]
    %v232 = vld [vmem:[#allocation5 + $0x588] sm:$0xff]
    %v233 = vld [vmem:[#allocation5 + $0x590] sm:$0xff]
    %v234 = vld [vmem:[#allocation5 + $0x598] sm:$0xff]
    %v235 = vld [vmem:[#allocation5 + $0x5a0] sm:$0xff]
    %v236 = vld [vmem:[#allocation5 + $0x5a8] sm:$0xff]
    %v237 = vld [vmem:[#allocation5 + $0x5b0] sm:$0xff]
    %v238 = vld [vmem:[#allocation5 + $0x5b8] sm:$0xff]
    %v239 = vld [vmem:[#allocation5 + $0x5c0] sm:$0xff]
    %v240 = vld [vmem:[#allocation5 + $0x5c8] sm:$0xff]
    %v241 = vld [vmem:[#allocation5 + $0x5d0] sm:$0xff]
    %v242 = vld [vmem:[#allocation5 + $0x5d8] sm:$0xff]
    %v243 = vld [vmem:[#allocation5 + $0x5e0] sm:$0xff]
    %v244 = vld [vmem:[#allocation5 + $0x5e8] sm:$0xff]
    %v245 = vld [vmem:[#allocation5 + $0x5f0] sm:$0xff]
    %v246 = vld [vmem:[#allocation5 + $0x5f8] sm:$0xff]
    %v247 = vld [vmem:[#allocation7] sm:$0xf]
    %v249 = vlaneseq
    %v250 = vshrl.u32 %v249, 7
    %v251 = vsub.s32 0, %v250
    %v252 = vrot.slane %v247, %v251
    %v253 = vlaneseq
    %v254 = vshrl.u32 %v253, 7
    %v255 = vsub.s32 1, %v254
    %v256 = vrot.slane %v247, %v255
    %v257 = vlaneseq
    %v258 = vshrl.u32 %v257, 7
    %v259 = vsub.s32 2, %v258
    %v260 = vrot.slane %v247, %v259
    %v261 = vlaneseq
    %v262 = vshrl.u32 %v261, 7
    %v263 = vsub.s32 3, %v262
    %v264 = vrot.slane %v247, %v263
    %v272 = vunpack.c.l.b16 %v52
    %v273 = vunpack.c.h.b16 %v52
    %v274 = vunpack.c.l.b16 %v53
    %v275 = vunpack.c.h.b16 %v53
    %v276 = vunpack.c.l.b16 %v54
    %v277 = vunpack.c.h.b16 %v54
    %v278 = vpack.c.b16 %v272, %v272
    %v279 = vpack.c.b16 %v273, %v273
    %v280 = vpack.c.b16 %v274, %v274
    %v281 = vpack.c.b16 %v275, %v275
    %v282 = vpack.c.b16 %v276, %v276
    %v283 = vpack.c.b16 %v277, %v277
    %v482 = vunpack.c.l.b16 %v55
    %v483 = vunpack.c.h.b16 %v55
    %v484 = vunpack.c.l.b16 %v56
    %v485 = vunpack.c.h.b16 %v56
    %v486 = vunpack.c.l.b16 %v57
    %v487 = vunpack.c.h.b16 %v57
    %v488 = vunpack.c.l.b16 %v58
    %v489 = vunpack.c.h.b16 %v58
    %v490 = vunpack.c.l.b16 %v59
    %v491 = vunpack.c.h.b16 %v59
    %v492 = vunpack.c.l.b16 %v60
    %v493 = vunpack.c.h.b16 %v60
    %v494 = vunpack.c.l.b16 %v61
    %v495 = vunpack.c.h.b16 %v61
    %v496 = vunpack.c.l.b16 %v62
    %v497 = vunpack.c.h.b16 %v62
    %v498 = vunpack.c.l.b16 %v63
    %v499 = vunpack.c.h.b16 %v63
    %v500 = vunpack.c.l.b16 %v64
    %v501 = vunpack.c.h.b16 %v64
    %v502 = vunpack.c.l.b16 %v65
    %v503 = vunpack.c.h.b16 %v65
    %v504 = vunpack.c.l.b16 %v66
    %v505 = vunpack.c.h.b16 %v66
    %v506 = vunpack.c.l.b16 %v67
    %v507 = vunpack.c.h.b16 %v67
    %v508 = vunpack.c.l.b16 %v68
    %v509 = vunpack.c.h.b16 %v68
    %v510 = vunpack.c.l.b16 %v69
    %v511 = vunpack.c.h.b16 %v69
    %v512 = vunpack.c.l.b16 %v70
    %v513 = vunpack.c.h.b16 %v70
    %v514 = vunpack.c.l.b16 %v71
    %v515 = vunpack.c.h.b16 %v71
    %v516 = vunpack.c.l.b16 %v72
    %v517 = vunpack.c.h.b16 %v72
    %v518 = vunpack.c.l.b16 %v73
    %v519 = vunpack.c.h.b16 %v73
    %v520 = vunpack.c.l.b16 %v74
    %v521 = vunpack.c.h.b16 %v74
    %v522 = vunpack.c.l.b16 %v75
    %v523 = vunpack.c.h.b16 %v75
    %v524 = vunpack.c.l.b16 %v76
    %v525 = vunpack.c.h.b16 %v76
    %v526 = vunpack.c.l.b16 %v77
    %v527 = vunpack.c.h.b16 %v77
    %v528 = vunpack.c.l.b16 %v78
    %v529 = vunpack.c.h.b16 %v78
    %v530 = vunpack.c.l.b16 %v79
    %v531 = vunpack.c.h.b16 %v79
    %v532 = vunpack.c.l.b16 %v80
    %v533 = vunpack.c.h.b16 %v80
    %v534 = vunpack.c.l.b16 %v81
    %v535 = vunpack.c.h.b16 %v81
    %v536 = vunpack.c.l.b16 %v82
    %v537 = vunpack.c.h.b16 %v82
    %v538 = vunpack.c.l.b16 %v83
    %v539 = vunpack.c.h.b16 %v83
    %v540 = vunpack.c.l.b16 %v84
    %v541 = vunpack.c.h.b16 %v84
    %v542 = vunpack.c.l.b16 %v85
    %v543 = vunpack.c.h.b16 %v85
    %v544 = vunpack.c.l.b16 %v86
    %v545 = vunpack.c.h.b16 %v86
    %v546 = vunpack.c.l.b16 %v87
    %v547 = vunpack.c.h.b16 %v87
    %v548 = vunpack.c.l.b16 %v88
    %v549 = vunpack.c.h.b16 %v88
    %v550 = vunpack.c.l.b16 %v89
    %v551 = vunpack.c.h.b16 %v89
    %v552 = vunpack.c.l.b16 %v90
    %v553 = vunpack.c.h.b16 %v90
    %v554 = vunpack.c.l.b16 %v91
    %v555 = vunpack.c.h.b16 %v91
    %v556 = vunpack.c.l.b16 %v92
    %v557 = vunpack.c.h.b16 %v92
    %v558 = vunpack.c.l.b16 %v93
    %v559 = vunpack.c.h.b16 %v93
    %v560 = vunpack.c.l.b16 %v94
    %v561 = vunpack.c.h.b16 %v94
    %v562 = vunpack.c.l.b16 %v95
    %v563 = vunpack.c.h.b16 %v95
    %v564 = vunpack.c.l.b16 %v96
    %v565 = vunpack.c.h.b16 %v96
    %v566 = vunpack.c.l.b16 %v97
    %v567 = vunpack.c.h.b16 %v97
    %v568 = vunpack.c.l.b16 %v98
    %v569 = vunpack.c.h.b16 %v98
    %v570 = vunpack.c.l.b16 %v99
    %v571 = vunpack.c.h.b16 %v99
    %v572 = vunpack.c.l.b16 %v100
    %v573 = vunpack.c.h.b16 %v100
    %v574 = vunpack.c.l.b16 %v101
    %v575 = vunpack.c.h.b16 %v101
    %v576 = vunpack.c.l.b16 %v102
    %v577 = vunpack.c.h.b16 %v102
    %v578 = vunpack.c.l.b16 %v103
    %v579 = vunpack.c.h.b16 %v103
    %v580 = vunpack.c.l.b16 %v104
    %v581 = vunpack.c.h.b16 %v104
    %v582 = vunpack.c.l.b16 %v105
    %v583 = vunpack.c.h.b16 %v105
    %v584 = vunpack.c.l.b16 %v106
    %v585 = vunpack.c.h.b16 %v106
    %v586 = vunpack.c.l.b16 %v107
    %v587 = vunpack.c.h.b16 %v107
    %v588 = vunpack.c.l.b16 %v108
    %v589 = vunpack.c.h.b16 %v108
    %v590 = vunpack.c.l.b16 %v109
    %v591 = vunpack.c.h.b16 %v109
    %v592 = vunpack.c.l.b16 %v110
    %v593 = vunpack.c.h.b16 %v110
    %v594 = vunpack.c.l.b16 %v111
    %v595 = vunpack.c.h.b16 %v111
    %v596 = vunpack.c.l.b16 %v112
    %v597 = vunpack.c.h.b16 %v112
    %v598 = vunpack.c.l.b16 %v113
    %v599 = vunpack.c.h.b16 %v113
    %v600 = vunpack.c.l.b16 %v114
    %v601 = vunpack.c.h.b16 %v114
    %v602 = vunpack.c.l.b16 %v115
    %v603 = vunpack.c.h.b16 %v115
    %v604 = vunpack.c.l.b16 %v116
    %v605 = vunpack.c.h.b16 %v116
    %v606 = vunpack.c.l.b16 %v117
    %v607 = vunpack.c.h.b16 %v117
    %v608 = vunpack.c.l.b16 %v118
    %v609 = vunpack.c.h.b16 %v118
    %v610 = vunpack.c.l.b16 %v119
    %v611 = vunpack.c.h.b16 %v119
    %v612 = vunpack.c.l.b16 %v120
    %v613 = vunpack.c.h.b16 %v120
    %v614 = vunpack.c.l.b16 %v121
    %v615 = vunpack.c.h.b16 %v121
    %v616 = vunpack.c.l.b16 %v122
    %v617 = vunpack.c.h.b16 %v122
    %v618 = vunpack.c.l.b16 %v123
    %v619 = vunpack.c.h.b16 %v123
    %v620 = vunpack.c.l.b16 %v124
    %v621 = vunpack.c.h.b16 %v124
    %v622 = vunpack.c.l.b16 %v125
    %v623 = vunpack.c.h.b16 %v125
    %v624 = vunpack.c.l.b16 %v126
    %v625 = vunpack.c.h.b16 %v126
    %v626 = vunpack.c.l.b16 %v127
    %v627 = vunpack.c.h.b16 %v127
    %v628 = vunpack.c.l.b16 %v128
    %v629 = vunpack.c.h.b16 %v128
    %v630 = vunpack.c.l.b16 %v129
    %v631 = vunpack.c.h.b16 %v129
    %v632 = vunpack.c.l.b16 %v130
    %v633 = vunpack.c.h.b16 %v130
    %v634 = vunpack.c.l.b16 %v131
    %v635 = vunpack.c.h.b16 %v131
    %v636 = vunpack.c.l.b16 %v132
    %v637 = vunpack.c.h.b16 %v132
    %v638 = vunpack.c.l.b16 %v133
    %v639 = vunpack.c.h.b16 %v133
    %v640 = vunpack.c.l.b16 %v134
    %v641 = vunpack.c.h.b16 %v134
    %v642 = vunpack.c.l.b16 %v135
    %v643 = vunpack.c.h.b16 %v135
    %v644 = vunpack.c.l.b16 %v136
    %v645 = vunpack.c.h.b16 %v136
    %v646 = vunpack.c.l.b16 %v137
    %v647 = vunpack.c.h.b16 %v137
    %v648 = vunpack.c.l.b16 %v138
    %v649 = vunpack.c.h.b16 %v138
    %v650 = vunpack.c.l.b16 %v139
    %v651 = vunpack.c.h.b16 %v139
    %v652 = vunpack.c.l.b16 %v140
    %v653 = vunpack.c.h.b16 %v140
    %v654 = vunpack.c.l.b16 %v141
    %v655 = vunpack.c.h.b16 %v141
    %v656 = vunpack.c.l.b16 %v142
    %v657 = vunpack.c.h.b16 %v142
    %v658 = vunpack.c.l.b16 %v143
    %v659 = vunpack.c.h.b16 %v143
    %v660 = vunpack.c.l.b16 %v144
    %v661 = vunpack.c.h.b16 %v144
    %v662 = vunpack.c.l.b16 %v145
    %v663 = vunpack.c.h.b16 %v145
    %v664 = vunpack.c.l.b16 %v146
    %v665 = vunpack.c.h.b16 %v146
    %v666 = vunpack.c.l.b16 %v147
    %v667 = vunpack.c.h.b16 %v147
    %v668 = vunpack.c.l.b16 %v148
    %v669 = vunpack.c.h.b16 %v148
    %v670 = vunpack.c.l.b16 %v149
    %v671 = vunpack.c.h.b16 %v149
    %v672 = vunpack.c.l.b16 %v150
    %v673 = vunpack.c.h.b16 %v150
    %v674 = vunpack.c.l.b16 %v151
    %v675 = vunpack.c.h.b16 %v151
    %v676 = vunpack.c.l.b16 %v152
    %v677 = vunpack.c.h.b16 %v152
    %v678 = vunpack.c.l.b16 %v153
    %v679 = vunpack.c.h.b16 %v153
    %v680 = vunpack.c.l.b16 %v154
    %v681 = vunpack.c.h.b16 %v154
    %v682 = vunpack.c.l.b16 %v155
    %v683 = vunpack.c.h.b16 %v155
    %v684 = vunpack.c.l.b16 %v156
    %v685 = vunpack.c.h.b16 %v156
    %v686 = vunpack.c.l.b16 %v157
    %v687 = vunpack.c.h.b16 %v157
    %v688 = vunpack.c.l.b16 %v158
    %v689 = vunpack.c.h.b16 %v158
    %v690 = vunpack.c.l.b16 %v159
    %v691 = vunpack.c.h.b16 %v159
    %v692 = vunpack.c.l.b16 %v160
    %v693 = vunpack.c.h.b16 %v160
    %v694 = vunpack.c.l.b16 %v161
    %v695 = vunpack.c.h.b16 %v161
    %v696 = vunpack.c.l.b16 %v162
    %v697 = vunpack.c.h.b16 %v162
    %v698 = vunpack.c.l.b16 %v163
    %v699 = vunpack.c.h.b16 %v163
    %v700 = vunpack.c.l.b16 %v164
    %v701 = vunpack.c.h.b16 %v164
    %v702 = vunpack.c.l.b16 %v165
    %v703 = vunpack.c.h.b16 %v165
    %v704 = vunpack.c.l.b16 %v166
    %v705 = vunpack.c.h.b16 %v166
    %v706 = vunpack.c.l.b16 %v167
    %v707 = vunpack.c.h.b16 %v167
    %v708 = vunpack.c.l.b16 %v168
    %v709 = vunpack.c.h.b16 %v168
    %v710 = vunpack.c.l.b16 %v169
    %v711 = vunpack.c.h.b16 %v169
    %v712 = vunpack.c.l.b16 %v170
    %v713 = vunpack.c.h.b16 %v170
    %v714 = vunpack.c.l.b16 %v171
    %v715 = vunpack.c.h.b16 %v171
    %v716 = vunpack.c.l.b16 %v172
    %v717 = vunpack.c.h.b16 %v172
    %v718 = vunpack.c.l.b16 %v173
    %v719 = vunpack.c.h.b16 %v173
    %v720 = vunpack.c.l.b16 %v174
    %v721 = vunpack.c.h.b16 %v174
    %v722 = vunpack.c.l.b16 %v175
    %v723 = vunpack.c.h.b16 %v175
    %v724 = vunpack.c.l.b16 %v176
    %v725 = vunpack.c.h.b16 %v176
    %v726 = vunpack.c.l.b16 %v177
    %v727 = vunpack.c.h.b16 %v177
    %v728 = vunpack.c.l.b16 %v178
    %v729 = vunpack.c.h.b16 %v178
    %v730 = vunpack.c.l.b16 %v179
    %v731 = vunpack.c.h.b16 %v179
    %v732 = vunpack.c.l.b16 %v180
    %v733 = vunpack.c.h.b16 %v180
    %v734 = vunpack.c.l.b16 %v181
    %v735 = vunpack.c.h.b16 %v181
    %v736 = vunpack.c.l.b16 %v182
    %v737 = vunpack.c.h.b16 %v182
    %v738 = vunpack.c.l.b16 %v183
    %v739 = vunpack.c.h.b16 %v183
    %v740 = vunpack.c.l.b16 %v184
    %v741 = vunpack.c.h.b16 %v184
    %v742 = vunpack.c.l.b16 %v185
    %v743 = vunpack.c.h.b16 %v185
    %v744 = vunpack.c.l.b16 %v186
    %v745 = vunpack.c.h.b16 %v186
    %v746 = vunpack.c.l.b16 %v187
    %v747 = vunpack.c.h.b16 %v187
    %v748 = vunpack.c.l.b16 %v188
    %v749 = vunpack.c.h.b16 %v188
    %v750 = vunpack.c.l.b16 %v189
    %v751 = vunpack.c.h.b16 %v189
    %v752 = vunpack.c.l.b16 %v190
    %v753 = vunpack.c.h.b16 %v190
    %v754 = vunpack.c.l.b16 %v191
    %v755 = vunpack.c.h.b16 %v191
    %v756 = vunpack.c.l.b16 %v192
    %v757 = vunpack.c.h.b16 %v192
    %v758 = vunpack.c.l.b16 %v193
    %v759 = vunpack.c.h.b16 %v193
    %v760 = vunpack.c.l.b16 %v194
    %v761 = vunpack.c.h.b16 %v194
    %v762 = vunpack.c.l.b16 %v195
    %v763 = vunpack.c.h.b16 %v195
    %v764 = vunpack.c.l.b16 %v196
    %v765 = vunpack.c.h.b16 %v196
    %v766 = vunpack.c.l.b16 %v197
    %v767 = vunpack.c.h.b16 %v197
    %v768 = vunpack.c.l.b16 %v198
    %v769 = vunpack.c.h.b16 %v198
    %v770 = vunpack.c.l.b16 %v199
    %v771 = vunpack.c.h.b16 %v199
    %v772 = vunpack.c.l.b16 %v200
    %v773 = vunpack.c.h.b16 %v200
    %v774 = vunpack.c.l.b16 %v201
    %v775 = vunpack.c.h.b16 %v201
    %v776 = vunpack.c.l.b16 %v202
    %v777 = vunpack.c.h.b16 %v202
    %v778 = vunpack.c.l.b16 %v203
    %v779 = vunpack.c.h.b16 %v203
    %v780 = vunpack.c.l.b16 %v204
    %v781 = vunpack.c.h.b16 %v204
    %v782 = vunpack.c.l.b16 %v205
    %v783 = vunpack.c.h.b16 %v205
    %v784 = vunpack.c.l.b16 %v206
    %v785 = vunpack.c.h.b16 %v206
    %v786 = vunpack.c.l.b16 %v207
    %v787 = vunpack.c.h.b16 %v207
    %v788 = vunpack.c.l.b16 %v208
    %v789 = vunpack.c.h.b16 %v208
    %v790 = vunpack.c.l.b16 %v209
    %v791 = vunpack.c.h.b16 %v209
    %v792 = vunpack.c.l.b16 %v210
    %v793 = vunpack.c.h.b16 %v210
    %v794 = vunpack.c.l.b16 %v211
    %v795 = vunpack.c.h.b16 %v211
    %v796 = vunpack.c.l.b16 %v212
    %v797 = vunpack.c.h.b16 %v212
    %v798 = vunpack.c.l.b16 %v213
    %v799 = vunpack.c.h.b16 %v213
    %v800 = vunpack.c.l.b16 %v214
    %v801 = vunpack.c.h.b16 %v214
    %v802 = vunpack.c.l.b16 %v215
    %v803 = vunpack.c.h.b16 %v215
    %v804 = vunpack.c.l.b16 %v216
    %v805 = vunpack.c.h.b16 %v216
    %v806 = vunpack.c.l.b16 %v217
    %v807 = vunpack.c.h.b16 %v217
    %v808 = vunpack.c.l.b16 %v218
    %v809 = vunpack.c.h.b16 %v218
    %v810 = vunpack.c.l.b16 %v219
    %v811 = vunpack.c.h.b16 %v219
    %v812 = vunpack.c.l.b16 %v220
    %v813 = vunpack.c.h.b16 %v220
    %v814 = vunpack.c.l.b16 %v221
    %v815 = vunpack.c.h.b16 %v221
    %v816 = vunpack.c.l.b16 %v222
    %v817 = vunpack.c.h.b16 %v222
    %v818 = vunpack.c.l.b16 %v223
    %v819 = vunpack.c.h.b16 %v223
    %v820 = vunpack.c.l.b16 %v224
    %v821 = vunpack.c.h.b16 %v224
    %v822 = vunpack.c.l.b16 %v225
    %v823 = vunpack.c.h.b16 %v225
    %v824 = vunpack.c.l.b16 %v226
    %v825 = vunpack.c.h.b16 %v226
    %v826 = vunpack.c.l.b16 %v227
    %v827 = vunpack.c.h.b16 %v227
    %v828 = vunpack.c.l.b16 %v228
    %v829 = vunpack.c.h.b16 %v228
    %v830 = vunpack.c.l.b16 %v229
    %v831 = vunpack.c.h.b16 %v229
    %v832 = vunpack.c.l.b16 %v230
    %v833 = vunpack.c.h.b16 %v230
    %v834 = vunpack.c.l.b16 %v231
    %v835 = vunpack.c.h.b16 %v231
    %v836 = vunpack.c.l.b16 %v232
    %v837 = vunpack.c.h.b16 %v232
    %v838 = vunpack.c.l.b16 %v233
    %v839 = vunpack.c.h.b16 %v233
    %v840 = vunpack.c.l.b16 %v234
    %v841 = vunpack.c.h.b16 %v234
    %v842 = vunpack.c.l.b16 %v235
    %v843 = vunpack.c.h.b16 %v235
    %v844 = vunpack.c.l.b16 %v236
    %v845 = vunpack.c.h.b16 %v236
    %v846 = vunpack.c.l.b16 %v237
    %v847 = vunpack.c.h.b16 %v237
    %v848 = vunpack.c.l.b16 %v238
    %v849 = vunpack.c.h.b16 %v238
    %v850 = vunpack.c.l.b16 %v239
    %v851 = vunpack.c.h.b16 %v239
    %v852 = vunpack.c.l.b16 %v240
    %v853 = vunpack.c.h.b16 %v240
    %v854 = vunpack.c.l.b16 %v241
    %v855 = vunpack.c.h.b16 %v241
    %v856 = vunpack.c.l.b16 %v242
    %v857 = vunpack.c.h.b16 %v242
    %v858 = vunpack.c.l.b16 %v243
    %v859 = vunpack.c.h.b16 %v243
    %v860 = vunpack.c.l.b16 %v244
    %v861 = vunpack.c.h.b16 %v244
    %v862 = vunpack.c.l.b16 %v245
    %v863 = vunpack.c.h.b16 %v245
    %v864 = vunpack.c.l.b16 %v246
    %v865 = vunpack.c.h.b16 %v246
    %v866 = vpack.c.b16 %v488, %v482
    %v867 = vpack.c.b16 %v489, %v483
    %v868 = vpack.c.b16 %v490, %v484
    %v869 = vpack.c.b16 %v491, %v485
    %v870 = vpack.c.b16 %v492, %v486
    %v871 = vpack.c.b16 %v493, %v487
    %v872 = vpack.c.b16 %v500, %v494
    %v873 = vpack.c.b16 %v501, %v495
    %v874 = vpack.c.b16 %v502, %v496
    %v875 = vpack.c.b16 %v503, %v497
    %v876 = vpack.c.b16 %v504, %v498
    %v877 = vpack.c.b16 %v505, %v499
    %v878 = vpack.c.b16 %v512, %v506
    %v879 = vpack.c.b16 %v513, %v507
    %v880 = vpack.c.b16 %v514, %v508
    %v881 = vpack.c.b16 %v515, %v509
    %v882 = vpack.c.b16 %v516, %v510
    %v883 = vpack.c.b16 %v517, %v511
    %v884 = vpack.c.b16 %v524, %v518
    %v885 = vpack.c.b16 %v525, %v519
    %v886 = vpack.c.b16 %v526, %v520
    %v887 = vpack.c.b16 %v527, %v521
    %v888 = vpack.c.b16 %v528, %v522
    %v889 = vpack.c.b16 %v529, %v523
    %v890 = vpack.c.b16 %v536, %v530
    %v891 = vpack.c.b16 %v537, %v531
    %v892 = vpack.c.b16 %v538, %v532
    %v893 = vpack.c.b16 %v539, %v533
    %v894 = vpack.c.b16 %v540, %v534
    %v895 = vpack.c.b16 %v541, %v535
    %v896 = vpack.c.b16 %v548, %v542
    %v897 = vpack.c.b16 %v549, %v543
    %v898 = vpack.c.b16 %v550, %v544
    %v899 = vpack.c.b16 %v551, %v545
    %v900 = vpack.c.b16 %v552, %v546
    %v901 = vpack.c.b16 %v553, %v547
    %v902 = vpack.c.b16 %v560, %v554
    %v903 = vpack.c.b16 %v561, %v555
    %v904 = vpack.c.b16 %v562, %v556
    %v905 = vpack.c.b16 %v563, %v557
    %v906 = vpack.c.b16 %v564, %v558
    %v907 = vpack.c.b16 %v565, %v559
    %v908 = vpack.c.b16 %v572, %v566
    %v909 = vpack.c.b16 %v573, %v567
    %v910 = vpack.c.b16 %v574, %v568
    %v911 = vpack.c.b16 %v575, %v569
    %v912 = vpack.c.b16 %v576, %v570
    %v913 = vpack.c.b16 %v577, %v571
    %v914 = vpack.c.b16 %v584, %v578
    %v915 = vpack.c.b16 %v585, %v579
    %v916 = vpack.c.b16 %v586, %v580
    %v917 = vpack.c.b16 %v587, %v581
    %v918 = vpack.c.b16 %v588, %v582
    %v919 = vpack.c.b16 %v589, %v583
    %v920 = vpack.c.b16 %v596, %v590
    %v921 = vpack.c.b16 %v597, %v591
    %v922 = vpack.c.b16 %v598, %v592
    %v923 = vpack.c.b16 %v599, %v593
    %v924 = vpack.c.b16 %v600, %v594
    %v925 = vpack.c.b16 %v601, %v595
    %v926 = vpack.c.b16 %v608, %v602
    %v927 = vpack.c.b16 %v609, %v603
    %v928 = vpack.c.b16 %v610, %v604
    %v929 = vpack.c.b16 %v611, %v605
    %v930 = vpack.c.b16 %v612, %v606
    %v931 = vpack.c.b16 %v613, %v607
    %v932 = vpack.c.b16 %v620, %v614
    %v933 = vpack.c.b16 %v621, %v615
    %v934 = vpack.c.b16 %v622, %v616
    %v935 = vpack.c.b16 %v623, %v617
    %v936 = vpack.c.b16 %v624, %v618
    %v937 = vpack.c.b16 %v625, %v619
    %v938 = vpack.c.b16 %v632, %v626
    %v939 = vpack.c.b16 %v633, %v627
    %v940 = vpack.c.b16 %v634, %v628
    %v941 = vpack.c.b16 %v635, %v629
    %v942 = vpack.c.b16 %v636, %v630
    %v943 = vpack.c.b16 %v637, %v631
    %v944 = vpack.c.b16 %v644, %v638
    %v945 = vpack.c.b16 %v645, %v639
    %v946 = vpack.c.b16 %v646, %v640
    %v947 = vpack.c.b16 %v647, %v641
    %v948 = vpack.c.b16 %v648, %v642
    %v949 = vpack.c.b16 %v649, %v643
    %v950 = vpack.c.b16 %v656, %v650
    %v951 = vpack.c.b16 %v657, %v651
    %v952 = vpack.c.b16 %v658, %v652
    %v953 = vpack.c.b16 %v659, %v653
    %v954 = vpack.c.b16 %v660, %v654
    %v955 = vpack.c.b16 %v661, %v655
    %v956 = vpack.c.b16 %v668, %v662
    %v957 = vpack.c.b16 %v669, %v663
    %v958 = vpack.c.b16 %v670, %v664
    %v959 = vpack.c.b16 %v671, %v665
    %v960 = vpack.c.b16 %v672, %v666
    %v961 = vpack.c.b16 %v673, %v667
    %v962 = vpack.c.b16 %v680, %v674
    %v963 = vpack.c.b16 %v681, %v675
    %v964 = vpack.c.b16 %v682, %v676
    %v965 = vpack.c.b16 %v683, %v677
    %v966 = vpack.c.b16 %v684, %v678
    %v967 = vpack.c.b16 %v685, %v679
    %v968 = vpack.c.b16 %v692, %v686
    %v969 = vpack.c.b16 %v693, %v687
    %v970 = vpack.c.b16 %v694, %v688
    %v971 = vpack.c.b16 %v695, %v689
    %v972 = vpack.c.b16 %v696, %v690
    %v973 = vpack.c.b16 %v697, %v691
    %v974 = vpack.c.b16 %v704, %v698
    %v975 = vpack.c.b16 %v705, %v699
    %v976 = vpack.c.b16 %v706, %v700
    %v977 = vpack.c.b16 %v707, %v701
    %v978 = vpack.c.b16 %v708, %v702
    %v979 = vpack.c.b16 %v709, %v703
    %v980 = vpack.c.b16 %v716, %v710
    %v981 = vpack.c.b16 %v717, %v711
    %v982 = vpack.c.b16 %v718, %v712
    %v983 = vpack.c.b16 %v719, %v713
    %v984 = vpack.c.b16 %v720, %v714
    %v985 = vpack.c.b16 %v721, %v715
    %v986 = vpack.c.b16 %v728, %v722
    %v987 = vpack.c.b16 %v729, %v723
    %v988 = vpack.c.b16 %v730, %v724
    %v989 = vpack.c.b16 %v731, %v725
    %v990 = vpack.c.b16 %v732, %v726
    %v991 = vpack.c.b16 %v733, %v727
    %v992 = vpack.c.b16 %v740, %v734
    %v993 = vpack.c.b16 %v741, %v735
    %v994 = vpack.c.b16 %v742, %v736
    %v995 = vpack.c.b16 %v743, %v737
    %v996 = vpack.c.b16 %v744, %v738
    %v997 = vpack.c.b16 %v745, %v739
    %v998 = vpack.c.b16 %v752, %v746
    %v999 = vpack.c.b16 %v753, %v747
    %v1000 = vpack.c.b16 %v754, %v748
    %v1001 = vpack.c.b16 %v755, %v749
    %v1002 = vpack.c.b16 %v756, %v750
    %v1003 = vpack.c.b16 %v757, %v751
    %v1004 = vpack.c.b16 %v764, %v758
    %v1005 = vpack.c.b16 %v765, %v759
    %v1006 = vpack.c.b16 %v766, %v760
    %v1007 = vpack.c.b16 %v767, %v761
    %v1008 = vpack.c.b16 %v768, %v762
    %v1009 = vpack.c.b16 %v769, %v763
    %v1010 = vpack.c.b16 %v776, %v770
    %v1011 = vpack.c.b16 %v777, %v771
    %v1012 = vpack.c.b16 %v778, %v772
    %v1013 = vpack.c.b16 %v779, %v773
    %v1014 = vpack.c.b16 %v780, %v774
    %v1015 = vpack.c.b16 %v781, %v775
    %v1016 = vpack.c.b16 %v788, %v782
    %v1017 = vpack.c.b16 %v789, %v783
    %v1018 = vpack.c.b16 %v790, %v784
    %v1019 = vpack.c.b16 %v791, %v785
    %v1020 = vpack.c.b16 %v792, %v786
    %v1021 = vpack.c.b16 %v793, %v787
    %v1022 = vpack.c.b16 %v800, %v794
    %v1023 = vpack.c.b16 %v801, %v795
    %v1024 = vpack.c.b16 %v802, %v796
    %v1025 = vpack.c.b16 %v803, %v797
    %v1026 = vpack.c.b16 %v804, %v798
    %v1027 = vpack.c.b16 %v805, %v799
    %v1028 = vpack.c.b16 %v812, %v806
    %v1029 = vpack.c.b16 %v813, %v807
    %v1030 = vpack.c.b16 %v814, %v808
    %v1031 = vpack.c.b16 %v815, %v809
    %v1032 = vpack.c.b16 %v816, %v810
    %v1033 = vpack.c.b16 %v817, %v811
    %v1034 = vpack.c.b16 %v824, %v818
    %v1035 = vpack.c.b16 %v825, %v819
    %v1036 = vpack.c.b16 %v826, %v820
    %v1037 = vpack.c.b16 %v827, %v821
    %v1038 = vpack.c.b16 %v828, %v822
    %v1039 = vpack.c.b16 %v829, %v823
    %v1040 = vpack.c.b16 %v836, %v830
    %v1041 = vpack.c.b16 %v837, %v831
    %v1042 = vpack.c.b16 %v838, %v832
    %v1043 = vpack.c.b16 %v839, %v833
    %v1044 = vpack.c.b16 %v840, %v834
    %v1045 = vpack.c.b16 %v841, %v835
    %v1046 = vpack.c.b16 %v848, %v842
    %v1047 = vpack.c.b16 %v849, %v843
    %v1048 = vpack.c.b16 %v850, %v844
    %v1049 = vpack.c.b16 %v851, %v845
    %v1050 = vpack.c.b16 %v852, %v846
    %v1051 = vpack.c.b16 %v853, %v847
    %v1052 = vpack.c.b16 %v860, %v854
    %v1053 = vpack.c.b16 %v861, %v855
    %v1054 = vpack.c.b16 %v862, %v856
    %v1055 = vpack.c.b16 %v863, %v857
    %v1056 = vpack.c.b16 %v864, %v858
    %v1057 = vpack.c.b16 %v865, %v859
    %1250 = vmatprep.subr.bf16.mxu0 %v909
    %1251 = vmatpush1.bf16.xpose.msra.mxu0 %v908
    %1252 = vmatprep.subr.bf16.mxu0 %v903
    %1253 = vmatpush1.bf16.xpose.msra.mxu0 %v902
    %1254 = vmatprep.subr.bf16.mxu0 %v897
    %1255 = vmatpush1.bf16.xpose.msra.mxu0 %v896
    %1256 = vmatprep.subr.bf16.mxu0 %v891
    %1257 = vmatpush1.bf16.xpose.msra.mxu0 %v890
    %1258 = vmatprep.subr.bf16.mxu0 %v885
    %1259 = vmatpush1.bf16.xpose.msra.mxu0 %v884
    %1260 = vmatprep.subr.bf16.mxu0 %v879
    %1261 = vmatpush1.bf16.xpose.msra.mxu0 %v878
    %1262 = vmatprep.subr.bf16.mxu0 %v873
    %1263 = vmatpush1.bf16.xpose.msra.mxu0 %v872
    %1264 = vmatprep.subr.bf16.mxu0 %v867
    %1265 = vmatpush1.bf16.xpose.msra.mxu0 %v866
    %1266 = vmatprep.subr.bf16.mxu0 %v957
    %1267 = vmatpush2.bf16.xpose.msra.mxu0 %v956
    %1268 = vmatprep.subr.bf16.mxu0 %v951
    %1269 = vmatpush2.bf16.xpose.msra.mxu0 %v950
    %1270 = vmatprep.subr.bf16.mxu0 %v945
    %1271 = vmatpush2.bf16.xpose.msra.mxu0 %v944
    %1272 = vmatprep.subr.bf16.mxu0 %v939
    %1273 = vmatpush2.bf16.xpose.msra.mxu0 %v938
    %1274 = vmatprep.subr.bf16.mxu0 %v933
    %1275 = vmatpush2.bf16.xpose.msra.mxu0 %v932
    %1276 = vmatprep.subr.bf16.mxu0 %v927
    %1277 = vmatpush2.bf16.xpose.msra.mxu0 %v926
    %1278 = vmatprep.subr.bf16.mxu0 %v921
    %1279 = vmatpush2.bf16.xpose.msra.mxu0 %v920
    %1280 = vmatprep.subr.bf16.mxu0 %v915
    %1281 = vmatpush2.bf16.xpose.msra.mxu0 %v914
    %1282 = vmatprep.mubr.bf16.mxu0 %v279
    %1283 = vmatmul.mubr.bf16.gmra.mxu0 %v278
    %v1284 = vpop.f32.mrf.mxu0
    %v1285 = vadd.f32 %v252, %v1284
    %v1286 = vpop.f32.mrf.mxu0
    %v1287 = vadd.f32 %v256, %v1286
    %v1288 = vpop.f32.mrf.mxu0
    %v1289 = vpop.f32.mrf.mxu0
    %1290 = vdwg.mxu0
    %1291 = vmatprep.subr.bf16.mxu0 %v911
    %1292 = vmatpush1.bf16.xpose.msra.mxu0 %v910
    %1293 = vmatprep.subr.bf16.mxu0 %v905
    %1294 = vmatpush1.bf16.xpose.msra.mxu0 %v904
    %1295 = vmatprep.subr.bf16.mxu0 %v899
    %1296 = vmatpush1.bf16.xpose.msra.mxu0 %v898
    %1297 = vmatprep.subr.bf16.mxu0 %v893
    %1298 = vmatpush1.bf16.xpose.msra.mxu0 %v892
    %1299 = vmatprep.subr.bf16.mxu0 %v887
    %1300 = vmatpush1.bf16.xpose.msra.mxu0 %v886
    %1301 = vmatprep.subr.bf16.mxu0 %v881
    %1302 = vmatpush1.bf16.xpose.msra.mxu0 %v880
    %1303 = vmatprep.subr.bf16.mxu0 %v875
    %1304 = vmatpush1.bf16.xpose.msra.mxu0 %v874
    %1305 = vmatprep.subr.bf16.mxu0 %v869
    %1306 = vmatpush1.bf16.xpose.msra.mxu0 %v868
    %1307 = vmatprep.subr.bf16.mxu0 %v959
    %1308 = vmatpush2.bf16.xpose.msra.mxu0 %v958
    %1309 = vmatprep.subr.bf16.mxu0 %v953
    %1310 = vmatpush2.bf16.xpose.msra.mxu0 %v952
    %1311 = vmatprep.subr.bf16.mxu0 %v947
    %1312 = vmatpush2.bf16.xpose.msra.mxu0 %v946
    %1313 = vmatprep.subr.bf16.mxu0 %v941
    %1314 = vmatpush2.bf16.xpose.msra.mxu0 %v940
    %1315 = vmatprep.subr.bf16.mxu0 %v935
    %1316 = vmatpush2.bf16.xpose.msra.mxu0 %v934
    %1317 = vmatprep.subr.bf16.mxu0 %v929
    %1318 = vmatpush2.bf16.xpose.msra.mxu0 %v928
    %1319 = vmatprep.subr.bf16.mxu0 %v923
    %1320 = vmatpush2.bf16.xpose.msra.mxu0 %v922
    %1321 = vmatprep.subr.bf16.mxu0 %v917
    %1322 = vmatpush2.bf16.xpose.msra.mxu0 %v916
    %1323 = vmatprep.mubr.bf16.mxu0 %v281
    %1324 = vmatmul.mubr.bf16.gmra.mxu0 %v280
    %v1325 = vpop.f32.mrf.mxu0
    %v1326 = vadd.f32 %v1285, %v1325
    %v1327 = vpop.f32.mrf.mxu0
    %v1328 = vadd.f32 %v1287, %v1327
    %v1329 = vpop.f32.mrf.mxu0
    %v1330 = vpop.f32.mrf.mxu0
    %1331 = vdwg.mxu0
    %1332 = vmatprep.subr.bf16.mxu0 %v913
    %1333 = vmatpush1.bf16.xpose.msra.mxu0 %v912
    %1334 = vmatprep.subr.bf16.mxu0 %v907
    %1335 = vmatpush1.bf16.xpose.msra.mxu0 %v906
    %1336 = vmatprep.subr.bf16.mxu0 %v901
    %1337 = vmatpush1.bf16.xpose.msra.mxu0 %v900
    %1338 = vmatprep.subr.bf16.mxu0 %v895
    %1339 = vmatpush1.bf16.xpose.msra.mxu0 %v894
    %1340 = vmatprep.subr.bf16.mxu0 %v889
    %1341 = vmatpush1.bf16.xpose.msra.mxu0 %v888
    %1342 = vmatprep.subr.bf16.mxu0 %v883
    %1343 = vmatpush1.bf16.xpose.msra.mxu0 %v882
    %1344 = vmatprep.subr.bf16.mxu0 %v877
    %1345 = vmatpush1.bf16.xpose.msra.mxu0 %v876
    %1346 = vmatprep.subr.bf16.mxu0 %v871
    %1347 = vmatpush1.bf16.xpose.msra.mxu0 %v870
    %1348 = vmatprep.subr.bf16.mxu0 %v961
    %1349 = vmatpush2.bf16.xpose.msra.mxu0 %v960
    %1350 = vmatprep.subr.bf16.mxu0 %v955
    %1351 = vmatpush2.bf16.xpose.msra.mxu0 %v954
    %1352 = vmatprep.subr.bf16.mxu0 %v949
    %1353 = vmatpush2.bf16.xpose.msra.mxu0 %v948
    %1354 = vmatprep.subr.bf16.mxu0 %v943
    %1355 = vmatpush2.bf16.xpose.msra.mxu0 %v942
    %1356 = vmatprep.subr.bf16.mxu0 %v937
    %1357 = vmatpush2.bf16.xpose.msra.mxu0 %v936
    %1358 = vmatprep.subr.bf16.mxu0 %v931
    %1359 = vmatpush2.bf16.xpose.msra.mxu0 %v930
    %1360 = vmatprep.subr.bf16.mxu0 %v925
    %1361 = vmatpush2.bf16.xpose.msra.mxu0 %v924
    %1362 = vmatprep.subr.bf16.mxu0 %v919
    %1363 = vmatpush2.bf16.xpose.msra.mxu0 %v918
    %1364 = vmatprep.mubr.bf16.mxu0 %v283
    %1365 = vmatmul.mubr.bf16.gmra.mxu0 %v282
    %v1366 = vpop.f32.mrf.mxu0
    %v1367 = vadd.f32 %v1326, %v1366
    %v1368 = vpop.f32.mrf.mxu0
    %v1369 = vadd.f32 %v1328, %v1368
    %v1370 = vpop.f32.mrf.mxu0
    %v1371 = vpop.f32.mrf.mxu0
    %1372 = vdwg.mxu0
    %1373 = vmatprep.subr.bf16.mxu0 %v1005
    %1374 = vmatpush1.bf16.xpose.msra.mxu0 %v1004
    %1375 = vmatprep.subr.bf16.mxu0 %v999
    %1376 = vmatpush1.bf16.xpose.msra.mxu0 %v998
    %1377 = vmatprep.subr.bf16.mxu0 %v993
    %1378 = vmatpush1.bf16.xpose.msra.mxu0 %v992
    %1379 = vmatprep.subr.bf16.mxu0 %v987
    %1380 = vmatpush1.bf16.xpose.msra.mxu0 %v986
    %1381 = vmatprep.subr.bf16.mxu0 %v981
    %1382 = vmatpush1.bf16.xpose.msra.mxu0 %v980
    %1383 = vmatprep.subr.bf16.mxu0 %v975
    %1384 = vmatpush1.bf16.xpose.msra.mxu0 %v974
    %1385 = vmatprep.subr.bf16.mxu0 %v969
    %1386 = vmatpush1.bf16.xpose.msra.mxu0 %v968
    %1387 = vmatprep.subr.bf16.mxu0 %v963
    %1388 = vmatpush1.bf16.xpose.msra.mxu0 %v962
    %1389 = vmatprep.subr.bf16.mxu0 %v1053
    %1390 = vmatpush2.bf16.xpose.msra.mxu0 %v1052
    %1391 = vmatprep.subr.bf16.mxu0 %v1047
    %1392 = vmatpush2.bf16.xpose.msra.mxu0 %v1046
    %1393 = vmatprep.subr.bf16.mxu0 %v1041
    %1394 = vmatpush2.bf16.xpose.msra.mxu0 %v1040
    %1395 = vmatprep.subr.bf16.mxu0 %v1035
    %1396 = vmatpush2.bf16.xpose.msra.mxu0 %v1034
    %1397 = vmatprep.subr.bf16.mxu0 %v1029
    %1398 = vmatpush2.bf16.xpose.msra.mxu0 %v1028
    %1399 = vmatprep.subr.bf16.mxu0 %v1023
    %1400 = vmatpush2.bf16.xpose.msra.mxu0 %v1022
    %1401 = vmatprep.subr.bf16.mxu0 %v1017
    %1402 = vmatpush2.bf16.xpose.msra.mxu0 %v1016
    %1403 = vmatprep.subr.bf16.mxu0 %v1011
    %1404 = vmatpush2.bf16.xpose.msra.mxu0 %v1010
    %1405 = vmatprep.mubr.bf16.mxu0 %v279
    %1406 = vmatmul.mubr.bf16.gmra.mxu0 %v278
    %v1407 = vpop.f32.mrf.mxu0
    %v1408 = vadd.f32 %v260, %v1407
    %v1409 = vpop.f32.mrf.mxu0
    %v1410 = vadd.f32 %v264, %v1409
    %v1411 = vpop.f32.mrf.mxu0
    %v1412 = vpop.f32.mrf.mxu0
    %1413 = vdwg.mxu0
    %1414 = vmatprep.subr.bf16.mxu0 %v1007
    %1415 = vmatpush1.bf16.xpose.msra.mxu0 %v1006
    %1416 = vmatprep.subr.bf16.mxu0 %v1001
    %1417 = vmatpush1.bf16.xpose.msra.mxu0 %v1000
    %1418 = vmatprep.subr.bf16.mxu0 %v995
    %1419 = vmatpush1.bf16.xpose.msra.mxu0 %v994
    %1420 = vmatprep.subr.bf16.mxu0 %v989
    %1421 = vmatpush1.bf16.xpose.msra.mxu0 %v988
    %1422 = vmatprep.subr.bf16.mxu0 %v983
    %1423 = vmatpush1.bf16.xpose.msra.mxu0 %v982
    %1424 = vmatprep.subr.bf16.mxu0 %v977
    %1425 = vmatpush1.bf16.xpose.msra.mxu0 %v976
    %1426 = vmatprep.subr.bf16.mxu0 %v971
    %1427 = vmatpush1.bf16.xpose.msra.mxu0 %v970
    %1428 = vmatprep.subr.bf16.mxu0 %v965
    %1429 = vmatpush1.bf16.xpose.msra.mxu0 %v964
    %1430 = vmatprep.subr.bf16.mxu0 %v1055
    %1431 = vmatpush2.bf16.xpose.msra.mxu0 %v1054
    %1432 = vmatprep.subr.bf16.mxu0 %v1049
    %1433 = vmatpush2.bf16.xpose.msra.mxu0 %v1048
    %1434 = vmatprep.subr.bf16.mxu0 %v1043
    %1435 = vmatpush2.bf16.xpose.msra.mxu0 %v1042
    %1436 = vmatprep.subr.bf16.mxu0 %v1037
    %1437 = vmatpush2.bf16.xpose.msra.mxu0 %v1036
    %1438 = vmatprep.subr.bf16.mxu0 %v1031
    %1439 = vmatpush2.bf16.xpose.msra.mxu0 %v1030
    %1440 = vmatprep.subr.bf16.mxu0 %v1025
    %1441 = vmatpush2.bf16.xpose.msra.mxu0 %v1024
    %1442 = vmatprep.subr.bf16.mxu0 %v1019
    %1443 = vmatpush2.bf16.xpose.msra.mxu0 %v1018
    %1444 = vmatprep.subr.bf16.mxu0 %v1013
    %1445 = vmatpush2.bf16.xpose.msra.mxu0 %v1012
    %1446 = vmatprep.mubr.bf16.mxu0 %v281
    %1447 = vmatmul.mubr.bf16.gmra.mxu0 %v280
    %v1448 = vpop.f32.mrf.mxu0
    %v1449 = vadd.f32 %v1408, %v1448
    %v1450 = vpop.f32.mrf.mxu0
    %v1451 = vadd.f32 %v1410, %v1450
    %v1452 = vpop.f32.mrf.mxu0
    %v1453 = vpop.f32.mrf.mxu0
    %1454 = vdwg.mxu0
    %1455 = vmatprep.subr.bf16.mxu0 %v1009
    %1456 = vmatpush1.bf16.xpose.msra.mxu0 %v1008
    %1457 = vmatprep.subr.bf16.mxu0 %v1003
    %1458 = vmatpush1.bf16.xpose.msra.mxu0 %v1002
    %1459 = vmatprep.subr.bf16.mxu0 %v997
    %1460 = vmatpush1.bf16.xpose.msra.mxu0 %v996
    %1461 = vmatprep.subr.bf16.mxu0 %v991
    %1462 = vmatpush1.bf16.xpose.msra.mxu0 %v990
    %1463 = vmatprep.subr.bf16.mxu0 %v985
    %1464 = vmatpush1.bf16.xpose.msra.mxu0 %v984
    %1465 = vmatprep.subr.bf16.mxu0 %v979
    %1466 = vmatpush1.bf16.xpose.msra.mxu0 %v978
    %1467 = vmatprep.subr.bf16.mxu0 %v973
    %1468 = vmatpush1.bf16.xpose.msra.mxu0 %v972
    %1469 = vmatprep.subr.bf16.mxu0 %v967
    %1470 = vmatpush1.bf16.xpose.msra.mxu0 %v966
    %1471 = vmatprep.subr.bf16.mxu0 %v1057
    %1472 = vmatpush2.bf16.xpose.msra.mxu0 %v1056
    %1473 = vmatprep.subr.bf16.mxu0 %v1051
    %1474 = vmatpush2.bf16.xpose.msra.mxu0 %v1050
    %1475 = vmatprep.subr.bf16.mxu0 %v1045
    %1476 = vmatpush2.bf16.xpose.msra.mxu0 %v1044
    %1477 = vmatprep.subr.bf16.mxu0 %v1039
    %1478 = vmatpush2.bf16.xpose.msra.mxu0 %v1038
    %1479 = vmatprep.subr.bf16.mxu0 %v1033
    %1480 = vmatpush2.bf16.xpose.msra.mxu0 %v1032
    %1481 = vmatprep.subr.bf16.mxu0 %v1027
    %1482 = vmatpush2.bf16.xpose.msra.mxu0 %v1026
    %1483 = vmatprep.subr.bf16.mxu0 %v1021
    %1484 = vmatpush2.bf16.xpose.msra.mxu0 %v1020
    %1485 = vmatprep.subr.bf16.mxu0 %v1015
    %1486 = vmatpush2.bf16.xpose.msra.mxu0 %v1014
    %1487 = vmatprep.mubr.bf16.mxu0 %v283
    %1488 = vmatmul.mubr.bf16.gmra.mxu0 %v282
    %v1489 = vpop.f32.mrf.mxu0
    %v1490 = vadd.f32 %v1449, %v1489
    %v1491 = vpop.f32.mrf.mxu0
    %v1492 = vadd.f32 %v1451, %v1491
    %v1493 = vpop.f32.mrf.mxu0
    %v1494 = vpop.f32.mrf.mxu0
    %1495 = vdwg.mxu0
    %1496 = vst [vmem:[#allocation8] sm:$0xff] %v1367
    %1497 = vst [vmem:[#allocation8 + $0x8] sm:$0xff] %v1369
    %1498 = vst [vmem:[#allocation8 + $0x10] sm:$0xff] %v1490
    %1499 = vst [vmem:[#allocation8 + $0x18] sm:$0xff] %v1492
    // Predicated region
    $region26: #{tpu_custom_call.1} parent=1 // pred_check
      _
    $region27: #{tpu_custom_call.1} parent=1 // pred_check_branch
      %1501 = sbr.rel (0) target = $region29
    $region28: #{tpu_custom_call.1} parent=1 // pred_region
      %s1503 = ssub.s32 512, 512
      %1504 = vsyncadd [#allocation4], %s1503
      %s1506 = sshll.u32 [#allocation8], 4
      %s1507 = int_to_ptr.vmem [resolvable:$true] %s1506
      %1509 = dma.vmem_to_hbm [thread:$0]  %s1507, 512, %s3, [#allocation4]
    $region29: #{tpu_custom_call.1} parent=1 // pred_fallthru
      _
    // Predicated region
    $region30: #{tpu_custom_call.1} parent=1 // pred_check
      _
    $region31: #{tpu_custom_call.1} parent=1 // pred_check_branch
      %1511 = sbr.rel (0) target = $region33
    $region32: #{tpu_custom_call.1} parent=1 // pred_region
      %1512 = dma.done [#allocation4], 512
    $region33: #{tpu_custom_call.1} parent=1 // pred_fallthru
      _
    %1513 = vsyncpa [#allocation3], 1
    %1514 = vsyncpa [#allocation6], 1
    %1515 = vsyncpa [#allocation4], 1

</llo_original>
